<compile_context>
chip_gen: v7x
topology: tpu7x:2x2x1
jax: 0.10.0
libtpu: 0.0.40
codegen_flags: <defaults>
</compile_context>

<pallas_src>
import jax
import jax.numpy as jnp
from jax import lax
from jax.experimental import pallas as pl
from jax.experimental.pallas import tpu as pltpu


# ----------------------------- configuration --------------------------------
JOINT_ORDER = [
    "fl_hip", "fl_thigh", "fl_calf",
    "fr_hip", "fr_thigh", "fr_calf",
    "rl_hip", "rl_thigh", "rl_calf",
    "rr_hip", "rr_thigh", "rr_calf",
]
STATE_DIM = 36                       # stands in for State.dim
ACTION_DIM = len(JOINT_ORDER)        # 12
SA_DIM = STATE_DIM + ACTION_DIM      # 48 fused [state | action] features
HIDDEN = 128
BATCH = 8
MAX_TB = 4096                        # VMEM is never the constraint here; this
                                     # cap keeps activations « default scoped VMEM.


def _round_up(x, m):
    return ((x + m - 1) // m) * m


def _num_batch_tiles():
    """v7x has 2 TensorCores/chip -> split the batch into exactly 2 'parallel'
    tiles.  Single-TC chips (v5e/v6e) get 1 tile so the grid is one step."""
    try:
        kind = jax.devices()[0].device_kind.lower()
    except Exception:
        return 1
    return 2 if "v7" in kind else 1


def _pick_batch_tile(B, ntiles, max_tb):
    """Batch tile: whole (tiny) batch, else largest 8-aligned per-core tile."""
    if B <= 8:
        return B                      # block == full array dim -> always legal
    per_tile = -(-B // ntiles)        # ceil(B / ntiles)
    tb = max(8, (per_tile // 8) * 8)  # multiple of 8, never exceeds B
    return min(tb, max_tb)


# ------------------------------ Pallas kernel --------------------------------
def critic_mlp_kernel(sa_ref, w1_ref, b1_ref, w2_ref, b2_ref, w3_ref, b3_ref,
                      out_ref):
    """Fused 3-layer MLP critic on one batch tile (all f32, MXU dots).

    sa_ref : (TB, 48)  fused [state | action] rows.
    w1:(48,H) b1:(1,H) w2:(H,H) b2:(1,H) w3:(1,H)  VMEM, resident across grid.
    b3     : (1, 1)    scalar in SMEM.
    out_ref: (1, 1, TB) lane-dense q row (one value per lane, unmasked stores).
    """
    # Layer 1: single K=48 dot over the fused state-action block.
    h1 = jnp.dot(sa_ref[...], w1_ref[...], preferred_element_type=jnp.float32)
    h1 = jnp.maximum(h1 + b1_ref[...], 0.0)                       # (TB, H)

    # Layer 2.
    h2 = jnp.dot(h1, w2_ref[...], preferred_element_type=jnp.float32)
    h2 = jnp.maximum(h2 + b2_ref[...], 0.0)                       # (TB, H)

    # Layer 3, transposed on the MXU so the result is lane-dense:
    #   q[0, b] = sum_h w3[0, h] * h2[b, h]            -> (1, TB)
    q = lax.dot_general(w3_ref[...], h2, (((1,), (1,)), ((), ())),
                        preferred_element_type=jnp.float32)
    out_ref[0] = q + b3_ref[0, 0]


def critic_pallas(sa, params, max_tb=MAX_TB):
    """Batched critic evaluation. sa:(B, 48) fused [state|action] -> (B, 1)."""
    w1, b1, w2, b2, w3, b3 = params
    B = sa.shape[0]

    ntiles = _num_batch_tiles()
    TB = _pick_batch_tile(B, ntiles, max_tb)
    grid_b = pl.cdiv(B, TB)          # ragged last tile handled by Pallas (no pad)

    const2d = lambda i: (0, 0)       # weights/biases: resident across the grid
    flops = 2 * B * (SA_DIM * HIDDEN + HIDDEN * HIDDEN + HIDDEN)
    bytes_accessed = 4 * (sa.size + w1.size + b1.size + w2.size + b2.size
                          + w3.size + b3.size + grid_b * TB)

    out = pl.pallas_call(
        critic_mlp_kernel,
        out_shape=jax.ShapeDtypeStruct((grid_b, 1, TB), jnp.float32),
        grid=(grid_b,),
        in_specs=[
            pl.BlockSpec((TB, SA_DIM), lambda i: (i, 0)),        # [state|action]
            pl.BlockSpec((SA_DIM, HIDDEN), const2d),             # W1
            pl.BlockSpec((1, HIDDEN), const2d),                  # b1
            pl.BlockSpec((HIDDEN, HIDDEN), const2d),             # W2
            pl.BlockSpec((1, HIDDEN), const2d),                  # b2
            pl.BlockSpec((1, HIDDEN), const2d),                  # w3 row
            pl.BlockSpec(memory_space=pltpu.MemorySpace.SMEM),   # b3 scalar
        ],
        out_specs=pl.BlockSpec((1, 1, TB), lambda i: (i, 0, 0)),
        compiler_params=pltpu.CompilerParams(
            dimension_semantics=("parallel",)),                  # v7x 2-TC split
        cost_estimate=pl.CostEstimate(flops=flops, transcendentals=0,
                                      bytes_accessed=bytes_accessed),
    )(sa, w1, b1, w2, b2, w3, b3)

    # (grid_b, 1, TB) flattens in batch order; rows >= B (ragged tail computed
    # on garbage-padded input) are dropped instead of padding inputs in HBM.
    return out.reshape(-1)[:B].reshape(B, 1)


# --------------------------- StandUpCritic wrapper ---------------------------
def init_params(key):
    k1, k2, k3 = jax.random.split(key, 3)
    w1 = jax.random.normal(k1, (SA_DIM, HIDDEN), jnp.float32) / jnp.sqrt(SA_DIM)
    b1 = jnp.zeros((1, HIDDEN), jnp.float32)
    w2 = jax.random.normal(k2, (HIDDEN, HIDDEN), jnp.float32) / jnp.sqrt(HIDDEN)
    b2 = jnp.zeros((1, HIDDEN), jnp.float32)
    w3 = jax.random.normal(k3, (1, HIDDEN), jnp.float32) / jnp.sqrt(HIDDEN)
    b3 = jnp.zeros((1, 1), jnp.float32)
    return (w1, b1, w2, b2, w3, b3)


def prepare_action(action_positions):
    """Mirror of StandUpCritic.prepare_action: dict joint -> (B,1), concat."""
    return jnp.concatenate([action_positions[j] for j in JOINT_ORDER], axis=-1)


def stand_up_critic_forward(state, action_positions, params, current_obs_dim):
    """Mirrors StandUpCritic.forward (obs-dim check is a Python-level branch)."""
    if current_obs_dim != STATE_DIM:
        return jnp.zeros((1, 1), jnp.float32)          # self.zero_res
    # One concat builds the fused (B,48) MLP input directly, folding
    # prepare_action's 12-way concat and nn_forward's [state;action] concat.
    sa = jnp.concatenate(
        [state] + [action_positions[j] for j in JOINT_ORDER], axis=-1)
    return critic_pallas(sa, params)


def critic_reference(sa, params):
    """Plain-JAX f32 reference."""
    w1, b1, w2, b2, w3, b3 = params
    hi = lax.Precision.HIGHEST
    h1 = jnp.maximum(jnp.dot(sa, w1, precision=hi) + b1, 0.0)
    h2 = jnp.maximum(jnp.dot(h1, w2, precision=hi) + b2, 0.0)
    return jnp.dot(h2, w3.T, precision=hi) + b3


# ---------------------------------- main --------------------------------------
if __name__ == "__main__":
    key = jax.random.PRNGKey(0)
    k_state, k_action, _ = jax.random.split(key, 3)
    params = init_params(jax.random.PRNGKey(42))

    # --- small batch (B=8): grid=(1,), block == full arrays ---
    state = jax.random.normal(k_state, (BATCH, STATE_DIM), jnp.float32)
    action_keys = jax.random.split(k_action, len(JOINT_ORDER))
    action_positions = {
        j: jax.random.normal(ak, (BATCH, 1), jnp.float32)
        for j, ak in zip(JOINT_ORDER, action_keys)
    }

    q = stand_up_critic_forward(state, action_positions, params,
                                current_obs_dim=STATE_DIM)
    q = jax.block_until_ready(q)
    assert q.shape == (BATCH, 1) and q.dtype == jnp.float32

    sa_small = jnp.concatenate([state, prepare_action(action_positions)], axis=-1)
    q_ref = critic_reference(sa_small, params)
    assert jnp.allclose(q, q_ref, atol=2e-3, rtol=2e-3), (
        jnp.max(jnp.abs(q - q_ref)))

    # --- degraded observation path -> zero_res exactly [[0.0]] ---
    q_zero = stand_up_critic_forward(state, action_positions, params,
                                     current_obs_dim=STATE_DIM - 1)
    q_zero = jax.block_until_ready(q_zero)
    assert q_zero.shape == (1, 1) and float(q_zero[0, 0]) == 0.0

    # --- larger batch (B=256): default generation-aware tiling
    #     (one tile on v5e/v6e, two parallel tiles on v7x) ---
    kb_s, kb_a = jax.random.split(jax.random.PRNGKey(7))
    big_state = jax.random.normal(kb_s, (256, STATE_DIM), jnp.float32)
    big_action = jax.random.normal(kb_a, (256, ACTION_DIM), jnp.float32)
    sa_big = jnp.concatenate([big_state, big_action], axis=-1)
    q_big = jax.block_until_ready(critic_pallas(sa_big, params))
    q_big_ref = critic_reference(sa_big, params)
    assert q_big.shape == (256, 1)
    assert jnp.allclose(q_big, q_big_ref, atol=2e-3, rtol=2e-3)

    # --- force a multi-step grid (TB=128, grid=(2,)) on any chip to exercise
    #     VMEM-resident weights across grid steps + lane-dense per-step stores ---
    q_tiled = jax.block_until_ready(critic_pallas(sa_big, params, max_tb=128))
    assert jnp.allclose(q_tiled, q_big_ref, atol=2e-3, rtol=2e-3)

    # --- ragged batch (B=100, not a multiple of the tile): no wrapper-side pad,
    #     Pallas handles the partial last input block; tail rows are dropped ---
    sa_ragged = sa_big[:100]
    q_rag = jax.block_until_ready(critic_pallas(sa_ragged, params))
    q_rag_ref = critic_reference(sa_ragged, params)
    assert q_rag.shape == (100, 1)
    assert jnp.allclose(q_rag, q_rag_ref, atol=2e-3, rtol=2e-3)

    print("KERNEL_OK")
</pallas_src>

<mosaic_0001>
module attributes {stable_mosaic.version = 11 : i64} {
  func.func @critic_mlp_kernel(%arg0: i32, %arg1: memref<8x48xf32, #tpu.memory_space<vmem>>, %arg2: memref<48x128xf32, #tpu.memory_space<vmem>>, %arg3: memref<1x128xf32, #tpu.memory_space<vmem>>, %arg4: memref<128x128xf32, #tpu.memory_space<vmem>>, %arg5: memref<1x128xf32, #tpu.memory_space<vmem>>, %arg6: memref<1x128xf32, #tpu.memory_space<vmem>>, %arg7: memref<1x1xf32, #tpu.memory_space<smem>>, %arg8: memref<1x1x8xf32, #tpu.memory_space<vmem>>) attributes {dimension_semantics = [#tpu.dimension_semantics<parallel>], iteration_bounds = array<i64: 1>, scalar_prefetch = 0 : i64, scratch_operands = 0 : i64, tpu.core_type = #tpu.core_type<tc>, window_params = [{transform_indices = @transform_0, window_bounds = array<i64: 8, 48>}, {pipeline_mode = #tpu.pipeline_mode<synchronous>, transform_indices = @transform_1, window_bounds = array<i64: 48, 128>}, {pipeline_mode = #tpu.pipeline_mode<synchronous>, transform_indices = @transform_2, window_bounds = array<i64: 1, 128>}, {pipeline_mode = #tpu.pipeline_mode<synchronous>, transform_indices = @transform_3, window_bounds = array<i64: 128, 128>}, {pipeline_mode = #tpu.pipeline_mode<synchronous>, transform_indices = @transform_4, window_bounds = array<i64: 1, 128>}, {pipeline_mode = #tpu.pipeline_mode<synchronous>, transform_indices = @transform_5, window_bounds = array<i64: 1, 128>}, {transform_indices = @transform_6, window_bounds = array<i64: 1, 1>}, {transform_indices = @transform_7, window_bounds = array<i64: 1, 1, 8>}]} {
    %c0 = arith.constant 0 : index
    %c0_0 = arith.constant 0 : index
    %0 = vector.load %arg1[%c0, %c0_0] : memref<8x48xf32, #tpu.memory_space<vmem>>, vector<8x48xf32>
    %c0_1 = arith.constant 0 : index
    %c0_2 = arith.constant 0 : index
    %1 = vector.load %arg2[%c0_1, %c0_2] : memref<48x128xf32, #tpu.memory_space<vmem>>, vector<48x128xf32>
    %cst = arith.constant dense<0.000000e+00> : vector<8x128xf32>
    %2 = tpu.matmul %0, %1, %cst {dimension_numbers = #tpu.dot_dimension_numbers<[1], [0], [0], [1], [0, 0, 1, 1], [], []>} : vector<8x48xf32>, vector<48x128xf32>, vector<8x128xf32> -> vector<8x128xf32>
    %c0_3 = arith.constant 0 : index
    %c0_4 = arith.constant 0 : index
    %3 = vector.load %arg3[%c0_3, %c0_4] : memref<1x128xf32, #tpu.memory_space<vmem>>, vector<1x128xf32>
    %4 = vector.broadcast %3 : vector<1x128xf32> to vector<8x128xf32>
    %5 = arith.addf %2, %4 : vector<8x128xf32>
    %cst_5 = arith.constant 0.000000e+00 : f32
    %6 = vector.broadcast %cst_5 : f32 to vector<8x128xf32>
    %7 = arith.maximumf %5, %6 : vector<8x128xf32>
    %c0_6 = arith.constant 0 : index
    %c0_7 = arith.constant 0 : index
    %8 = vector.load %arg4[%c0_6, %c0_7] : memref<128x128xf32, #tpu.memory_space<vmem>>, vector<128x128xf32>
    %cst_8 = arith.constant dense<0.000000e+00> : vector<8x128xf32>
    %9 = tpu.matmul %7, %8, %cst_8 {dimension_numbers = #tpu.dot_dimension_numbers<[1], [0], [0], [1], [0, 0, 1, 1], [], []>} : vector<8x128xf32>, vector<128x128xf32>, vector<8x128xf32> -> vector<8x128xf32>
    %c0_9 = arith.constant 0 : index
    %c0_10 = arith.constant 0 : index
    %10 = vector.load %arg5[%c0_9, %c0_10] : memref<1x128xf32, #tpu.memory_space<vmem>>, vector<1x128xf32>
    %11 = vector.broadcast %10 : vector<1x128xf32> to vector<8x128xf32>
    %12 = arith.addf %9, %11 : vector<8x128xf32>
    %cst_11 = arith.constant 0.000000e+00 : f32
    %13 = vector.broadcast %cst_11 : f32 to vector<8x128xf32>
    %14 = arith.maximumf %12, %13 : vector<8x128xf32>
    %c0_12 = arith.constant 0 : index
    %c0_13 = arith.constant 0 : index
    %15 = vector.load %arg6[%c0_12, %c0_13] : memref<1x128xf32, #tpu.memory_space<vmem>>, vector<1x128xf32>
    %cst_14 = arith.constant dense<0.000000e+00> : vector<1x8xf32>
    %16 = tpu.matmul %15, %14, %cst_14 {dimension_numbers = #tpu.dot_dimension_numbers<[1], [1], [0], [0], [0, 0, 1, 0], [], []>} : vector<1x128xf32>, vector<8x128xf32>, vector<1x8xf32> -> vector<1x8xf32>
    %c0_15 = arith.constant 0 : index
    %c0_16 = arith.constant 0 : index
    %17 = memref.load %arg7[%c0_15, %c0_16] : memref<1x1xf32, #tpu.memory_space<smem>>
    %18 = vector.broadcast %17 : f32 to vector<1x8xf32>
    %19 = arith.addf %16, %18 : vector<1x8xf32>
    %c0_17 = arith.constant 0 : index
    %c0_18 = arith.constant 0 : index
    %c0_19 = arith.constant 0 : index
    %20 = vector.load %arg8[%c0_17, %c0_18, %c0_19] : memref<1x1x8xf32, #tpu.memory_space<vmem>>, vector<1x1x8xf32>
    %21 = vector.shape_cast %20 : vector<1x1x8xf32> to vector<1x8xf32>
    %22 = vector.shape_cast %19 : vector<1x8xf32> to vector<1x1x8xf32>
    tpu.vector_store %arg8[%c0_17, %c0_18, %c0_19], %22 {strides = array<i32>} : memref<1x1x8xf32, #tpu.memory_space<vmem>>, vector<1x1x8xf32>,
    return
  }
  func.func @transform_0(%arg0: i32) -> (i32, i32) {
    %c0_i32 = arith.constant 0 : i32
    %c0_i32_0 = arith.constant 0 : i32
    return %arg0, %c0_i32 : i32, i32
  }
  func.func @transform_1(%arg0: i32) -> (i32, i32) {
    %c0_i32 = arith.constant 0 : i32
    %c0_i32_0 = arith.constant 0 : i32
    %c0_i32_1 = arith.constant 0 : i32
    return %c0_i32, %c0_i32_0 : i32, i32
  }
  func.func @transform_2(%arg0: i32) -> (i32, i32) {
    %c0_i32 = arith.constant 0 : i32
    %c0_i32_0 = arith.constant 0 : i32
    %c0_i32_1 = arith.constant 0 : i32
    return %c0_i32, %c0_i32_0 : i32, i32
  }
  func.func @transform_3(%arg0: i32) -> (i32, i32) {
    %c0_i32 = arith.constant 0 : i32
    %c0_i32_0 = arith.constant 0 : i32
    %c0_i32_1 = arith.constant 0 : i32
    return %c0_i32, %c0_i32_0 : i32, i32
  }
  func.func @transform_4(%arg0: i32) -> (i32, i32) {
    %c0_i32 = arith.constant 0 : i32
    %c0_i32_0 = arith.constant 0 : i32
    %c0_i32_1 = arith.constant 0 : i32
    return %c0_i32, %c0_i32_0 : i32, i32
  }
  func.func @transform_5(%arg0: i32) -> (i32, i32) {
    %c0_i32 = arith.constant 0 : i32
    %c0_i32_0 = arith.constant 0 : i32
    %c0_i32_1 = arith.constant 0 : i32
    return %c0_i32, %c0_i32_0 : i32, i32
  }
  func.func @transform_6(%arg0: i32) -> (i32, i32) {
    %c0_i32 = arith.constant 0 : i32
    %c0_i32_0 = arith.constant 0 : i32
    %c0_i32_1 = arith.constant 0 : i32
    return %c0_i32, %c0_i32_0 : i32, i32
  }
  func.func @transform_7(%arg0: i32) -> (i32, i32, i32) {
    %c0_i32 = arith.constant 0 : i32
    %c0_i32_0 = arith.constant 0 : i32
    %c0_i32_1 = arith.constant 0 : i32
    return %arg0, %c0_i32, %c0_i32_0 : i32, i32, i32
  }
}

</mosaic_0001>

<llo_original>
// kernel: tpu_custom_call.1
$region0: #{tpu_custom_call.1}
  #allocation0 [shape = 'u32[]', space=smem, size = 0x4, offset = 0x4, fixed_abs, tag = 'smem constant byte address 0x4 - core index']
  #allocation1 [shape = 'u32[144,128]{1,0:T(1,128)}', space=vmem, size = 0x12000, scoped, tag = 'internal scratch']
  #allocation2 [shape = 'f32[1,1]{1,0:T(1,128)S(6)}', space=smem, size = 0x200, scoped, tag = 'scoped memory for tpu_custom_call.1']
  %s0 = inlined_call_operand.hbm [shape: f32[8,48], index: 0, kind: input, shape index: {}]
  %s1 = inlined_call_operand.hbm [shape: f32[48,128], index: 1, kind: input, shape index: {}]
  %s2 = inlined_call_operand.vmem [shape: f32[1,128], index: 2, kind: input, shape index: {}]
  %s3 = inlined_call_operand.hbm [shape: f32[128,128], index: 3, kind: input, shape index: {}]
  %s4 = inlined_call_operand.vmem [shape: f32[1,128], index: 4, kind: input, shape index: {}]
  %s5 = inlined_call_operand.vmem [shape: f32[1,128], index: 5, kind: input, shape index: {}]
  %s6 = inlined_call_operand.<no memory space> [shape: f32[1,1], index: 6, kind: input, shape index: {}]
  %s7 = inlined_call_operand.hbm [shape: f32[1,1,8], index: 7, kind: output, shape index: {}]
  %s8 = sld [smem:[#allocation0]]
  $region50: #{tpu_custom_call.1} parent=0
    _
  %s10 = ssub.s32 1, %s8
  %s11 = scalar_select 0, %s10, %s8
  %12 = sst [smem:[#allocation2]] %s6
  $region1: #{tpu_custom_call.1} parent=0
    #allocation3 [shape = 'u8[4096]{0}', space=vmem, size = 0x1000, scoped, tag = 'input window, operand 0, single buffered']
    #allocation4 [shape = 's32[1]{0}', space=sflag, size = 0x4, scoped, tag = 'scoped memory for tpu_custom_call.1']
    #allocation5 [shape = 's32[1]{0}', space=sflag, size = 0x4, scoped, tag = 'scoped memory for tpu_custom_call.1']
    #allocation6 [shape = 'u8[24576]{0}', space=vmem, size = 0x6000, scoped, tag = 'input window, operand 1, single buffered']
    #allocation7 [shape = 's32[1]{0}', space=sflag, size = 0x4, scoped, tag = 'scoped memory for tpu_custom_call.1']
    #allocation8 [shape = 'u8[65536]{0}', space=vmem, size = 0x10000, scoped, tag = 'input window, operand 3, single buffered']
    #allocation9 [shape = 'u8[512]{0}', space=vmem, size = 0x400, scoped, tag = 'output window, operand 0, single buffered']
    %13 = vsyncpa [#allocation4], 0
    %14 = vsyncpa [#allocation7], 0
    %15 = vsyncpa [#allocation5], 0
    // Predicated region
    $region2: #{tpu_custom_call.1} parent=1 // pred_check
      _
    $region3: #{tpu_custom_call.1} parent=1 // pred_check_branch
      %17 = sbr.rel (0) target = $region5
    $region4: #{tpu_custom_call.1} parent=1 // pred_region
      %s19 = ssub.s32 128, 128
      %20 = vsyncadd [#allocation4], %s19
      %s22 = sshll.u32 [#allocation3], 4
      %s23 = int_to_ptr.vmem [resolvable:$true] %s22
      %25 = dma.hbm_to_vmem [thread:$0]  %s0, 128, %s23, [#allocation4]
    $region5: #{tpu_custom_call.1} parent=1 // pred_fallthru
      _
    // Predicated region
    $region6: #{tpu_custom_call.1} parent=1 // pred_check
      _
    $region7: #{tpu_custom_call.1} parent=1 // pred_check_branch
      %27 = sbr.rel (0) target = $region9
    $region8: #{tpu_custom_call.1} parent=1 // pred_region
      %s29 = ssub.s32 768, 768
      %30 = vsyncadd [#allocation7], %s29
      %s31 = sshll.u32 [#allocation6], 4
      %s32 = int_to_ptr.vmem [resolvable:$true] %s31
      %37 = dma.hbm_to_vmem [thread:$0]  %s1, 768, %s32, [#allocation7], 128, 128, 8
    $region9: #{tpu_custom_call.1} parent=1 // pred_fallthru
      _
    // Predicated region
    $region10: #{tpu_custom_call.1} parent=1 // pred_check
      _
    $region11: #{tpu_custom_call.1} parent=1 // pred_check_branch
      %39 = sbr.rel (0) target = $region13
    $region12: #{tpu_custom_call.1} parent=1 // pred_region
      _
    $region13: #{tpu_custom_call.1} parent=1 // pred_fallthru
      _
    // Predicated region
    $region14: #{tpu_custom_call.1} parent=1 // pred_check
      _
    $region15: #{tpu_custom_call.1} parent=1 // pred_check_branch
      %41 = sbr.rel (0) target = $region17
    $region16: #{tpu_custom_call.1} parent=1 // pred_region
      %s43 = ssub.s32 2048, 2048
      %44 = vsyncadd [#allocation7], %s43
      %s45 = sshll.u32 [#allocation8], 4
      %s46 = int_to_ptr.vmem [resolvable:$true] %s45
      %51 = dma.hbm_to_vmem [thread:$0]  %s3, 2048, %s46, [#allocation7], 128, 128, 8
    $region17: #{tpu_custom_call.1} parent=1 // pred_fallthru
      _
    // Predicated region
    $region18: #{tpu_custom_call.1} parent=1 // pred_check
      _
    $region19: #{tpu_custom_call.1} parent=1 // pred_check_branch
      %53 = sbr.rel (0) target = $region21
    $region20: #{tpu_custom_call.1} parent=1 // pred_region
      _
    $region21: #{tpu_custom_call.1} parent=1 // pred_fallthru
      _
    // Predicated region
    $region22: #{tpu_custom_call.1} parent=1 // pred_check
      _
    $region23: #{tpu_custom_call.1} parent=1 // pred_check_branch
      %55 = sbr.rel (0) target = $region25
    $region24: #{tpu_custom_call.1} parent=1 // pred_region
      _
    $region25: #{tpu_custom_call.1} parent=1 // pred_fallthru
      _
    // Predicated region
    $region26: #{tpu_custom_call.1} parent=1 // pred_check
      _
    $region27: #{tpu_custom_call.1} parent=1 // pred_check_branch
      %57 = sbr.rel (0) target = $region29
    $region28: #{tpu_custom_call.1} parent=1 // pred_region
      _
    $region29: #{tpu_custom_call.1} parent=1 // pred_fallthru
      _
    // Predicated region
    $region30: #{tpu_custom_call.1} parent=1 // pred_check
      _
    $region31: #{tpu_custom_call.1} parent=1 // pred_check_branch
      %59 = sbr.rel (0) target = $region33
    $region32: #{tpu_custom_call.1} parent=1 // pred_region
      %60 = dma.done [#allocation4], 128
    $region33: #{tpu_custom_call.1} parent=1 // pred_fallthru
      _
    // Predicated region
    $region34: #{tpu_custom_call.1} parent=1 // pred_check
      _
    $region35: #{tpu_custom_call.1} parent=1 // pred_check_branch
      %62 = sbr.rel (0) target = $region37
    $region36: #{tpu_custom_call.1} parent=1 // pred_region
      %63 = dma.done [#allocation7], 768
    $region37: #{tpu_custom_call.1} parent=1 // pred_fallthru
      _
    // Predicated region
    $region38: #{tpu_custom_call.1} parent=1 // pred_check
      _
    $region39: #{tpu_custom_call.1} parent=1 // pred_check_branch
      %65 = sbr.rel (0) target = $region41
    $region40: #{tpu_custom_call.1} parent=1 // pred_region
      %66 = dma.done [#allocation7], 2048
    $region41: #{tpu_custom_call.1} parent=1 // pred_fallthru
      _
    %v67 = vld [vmem:[#allocation3] sm:$0xff]
    %v68 = vld [vmem:[#allocation6] sm:$0xff]
    %v69 = vld [vmem:[#allocation6 + $0x8] sm:$0xff]
    %v70 = vld [vmem:[#allocation6 + $0x10] sm:$0xff]
    %v71 = vld [vmem:[#allocation6 + $0x18] sm:$0xff]
    %v72 = vld [vmem:[#allocation6 + $0x20] sm:$0xff]
    %v73 = vld [vmem:[#allocation6 + $0x28] sm:$0xff]
    %v74 = vld [vmem:[%s2] sm:$0x1]
    %v76 = vlaneseq
    %v77 = vshrl.u32 %v76, 7
    %v78 = vsub.s32 0, %v77
    %v79 = vrot.slane %v74, %v78
    %vm81 = vcmask 392192
    %v83 = vsel %vm81, %v67, 0
    %85 = vmatprep.subr.mxu0 0.0
    %86 = vmatpush1.msra.mxu0 %v68
    %87 = vmatprep.subr.mxu0 0.0
    %88 = vmatpush1.msra.mxu0 %v69
    %89 = vmatprep.subr.mxu0 0.0
    %90 = vmatpush1.msra.mxu0 %v70
    %91 = vmatprep.subr.mxu0 0.0
    %92 = vmatpush1.msra.mxu0 %v71
    %93 = vmatprep.subr.mxu0 0.0
    %94 = vmatpush1.msra.mxu0 %v72
    %95 = vmatprep.subr.mxu0 0.0
    %96 = vmatpush1.msra.mxu0 %v73
    %97 = vmatprep.subr.mxu0 0.0
    %98 = vmatpush1.msra.mxu0 0.0
    %99 = vmatprep.subr.mxu0 0.0
    %100 = vmatpush1.msra.mxu0 0.0
    %101 = vmatprep.subr.mxu0 0.0
    %102 = vmatpush1.msra.mxu0 0.0
    %103 = vmatprep.subr.mxu0 0.0
    %104 = vmatpush1.msra.mxu0 0.0
    %105 = vmatprep.subr.mxu0 0.0
    %106 = vmatpush1.msra.mxu0 0.0
    %107 = vmatprep.subr.mxu0 0.0
    %108 = vmatpush1.msra.mxu0 0.0
    %109 = vmatprep.subr.mxu0 0.0
    %110 = vmatpush1.msra.mxu0 0.0
    %111 = vmatprep.subr.mxu0 0.0
    %112 = vmatpush1.msra.mxu0 0.0
    %113 = vmatprep.subr.mxu0 0.0
    %114 = vmatpush1.msra.mxu0 0.0
    %115 = vmatprep.subr.mxu0 0.0
    %116 = vmatpush1.msra.mxu0 0.0
    %117 = vmatprep.subr.mxu0 0.0
    %118 = vmatpush1.msra.mxu0 0.0
    %119 = vmatprep.subr.mxu0 0.0
    %120 = vmatpush1.msra.mxu0 0.0
    %121 = vmatprep.subr.mxu0 0.0
    %122 = vmatpush1.msra.mxu0 0.0
    %123 = vmatprep.subr.mxu0 0.0
    %124 = vmatpush1.msra.mxu0 0.0
    %125 = vmatprep.subr.mxu0 0.0
    %126 = vmatpush1.msra.mxu0 0.0
    %127 = vmatprep.subr.mxu0 0.0
    %128 = vmatpush1.msra.mxu0 0.0
    %129 = vmatprep.subr.mxu0 0.0
    %130 = vmatpush1.msra.mxu0 0.0
    %131 = vmatprep.subr.mxu0 0.0
    %132 = vmatpush1.msra.mxu0 0.0
    %133 = vmatprep.subr.mxu0 0.0
    %134 = vmatpush1.msra.mxu0 0.0
    %135 = vmatprep.subr.mxu0 0.0
    %136 = vmatpush1.msra.mxu0 0.0
    %137 = vmatprep.subr.mxu0 0.0
    %138 = vmatpush1.msra.mxu0 0.0
    %139 = vmatprep.subr.mxu0 0.0
    %140 = vmatpush1.msra.mxu0 0.0
    %141 = vmatprep.subr.mxu0 0.0
    %142 = vmatpush1.msra.mxu0 0.0
    %143 = vmatprep.subr.mxu0 0.0
    %144 = vmatpush1.msra.mxu0 0.0
    %145 = vmatprep.subr.mxu0 0.0
    %146 = vmatpush1.msra.mxu0 0.0
    %147 = vmatprep.subr.mxu0 0.0
    %148 = vmatpush1.msra.mxu0 0.0
    %149 = vmatprep.mubr.f32.mxu0 0.0
    %150 = vmatmul.mubr.f32.gmra.mrb[0].mxu0 %v83
    %v151 = vpop.f32.mrb[0].mxu0
    %v152 = vadd.f32 %v79, %v151
    %v153 = vpop.f32.mrb[0].mxu0
    %154 = vdwg.mxu0
    %v155 = vmax.f32 %v152, 0.0
    %v156 = vld [vmem:[#allocation8] sm:$0xff]
    %v157 = vld [vmem:[#allocation8 + $0x8] sm:$0xff]
    %v158 = vld [vmem:[#allocation8 + $0x10] sm:$0xff]
    %v159 = vld [vmem:[#allocation8 + $0x18] sm:$0xff]
    %v160 = vld [vmem:[#allocation8 + $0x20] sm:$0xff]
    %v161 = vld [vmem:[#allocation8 + $0x28] sm:$0xff]
    %v162 = vld [vmem:[#allocation8 + $0x30] sm:$0xff]
    %v163 = vld [vmem:[#allocation8 + $0x38] sm:$0xff]
    %v164 = vld [vmem:[#allocation8 + $0x40] sm:$0xff]
    %v165 = vld [vmem:[#allocation8 + $0x48] sm:$0xff]
    %v166 = vld [vmem:[#allocation8 + $0x50] sm:$0xff]
    %v167 = vld [vmem:[#allocation8 + $0x58] sm:$0xff]
    %v168 = vld [vmem:[#allocation8 + $0x60] sm:$0xff]
    %v169 = vld [vmem:[#allocation8 + $0x68] sm:$0xff]
    %v170 = vld [vmem:[#allocation8 + $0x70] sm:$0xff]
    %v171 = vld [vmem:[#allocation8 + $0x78] sm:$0xff]
    %v172 = vld [vmem:[%s4] sm:$0x1]
    %v174 = vlaneseq
    %v175 = vshrl.u32 %v174, 7
    %v176 = vsub.s32 0, %v175
    %v177 = vrot.slane %v172, %v176
    %179 = vmatprep.subr.mxu0 0.0
    %180 = vmatpush1.msra.mxu0 %v156
    %181 = vmatprep.subr.mxu0 0.0
    %182 = vmatpush1.msra.mxu0 %v157
    %183 = vmatprep.subr.mxu0 0.0
    %184 = vmatpush1.msra.mxu0 %v158
    %185 = vmatprep.subr.mxu0 0.0
    %186 = vmatpush1.msra.mxu0 %v159
    %187 = vmatprep.subr.mxu0 0.0
    %188 = vmatpush1.msra.mxu0 %v160
    %189 = vmatprep.subr.mxu0 0.0
    %190 = vmatpush1.msra.mxu0 %v161
    %191 = vmatprep.subr.mxu0 0.0
    %192 = vmatpush1.msra.mxu0 %v162
    %193 = vmatprep.subr.mxu0 0.0
    %194 = vmatpush1.msra.mxu0 %v163
    %195 = vmatprep.subr.mxu0 0.0
    %196 = vmatpush1.msra.mxu0 %v164
    %197 = vmatprep.subr.mxu0 0.0
    %198 = vmatpush1.msra.mxu0 %v165
    %199 = vmatprep.subr.mxu0 0.0
    %200 = vmatpush1.msra.mxu0 %v166
    %201 = vmatprep.subr.mxu0 0.0
    %202 = vmatpush1.msra.mxu0 %v167
    %203 = vmatprep.subr.mxu0 0.0
    %204 = vmatpush1.msra.mxu0 %v168
    %205 = vmatprep.subr.mxu0 0.0
    %206 = vmatpush1.msra.mxu0 %v169
    %207 = vmatprep.subr.mxu0 0.0
    %208 = vmatpush1.msra.mxu0 %v170
    %209 = vmatprep.subr.mxu0 0.0
    %210 = vmatpush1.msra.mxu0 %v171
    %211 = vmatprep.subr.mxu0 0.0
    %212 = vmatpush1.msra.mxu0 0.0
    %213 = vmatprep.subr.mxu0 0.0
    %214 = vmatpush1.msra.mxu0 0.0
    %215 = vmatprep.subr.mxu0 0.0
    %216 = vmatpush1.msra.mxu0 0.0
    %217 = vmatprep.subr.mxu0 0.0
    %218 = vmatpush1.msra.mxu0 0.0
    %219 = vmatprep.subr.mxu0 0.0
    %220 = vmatpush1.msra.mxu0 0.0
    %221 = vmatprep.subr.mxu0 0.0
    %222 = vmatpush1.msra.mxu0 0.0
    %223 = vmatprep.subr.mxu0 0.0
    %224 = vmatpush1.msra.mxu0 0.0
    %225 = vmatprep.subr.mxu0 0.0
    %226 = vmatpush1.msra.mxu0 0.0
    %227 = vmatprep.subr.mxu0 0.0
    %228 = vmatpush1.msra.mxu0 0.0
    %229 = vmatprep.subr.mxu0 0.0
    %230 = vmatpush1.msra.mxu0 0.0
    %231 = vmatprep.subr.mxu0 0.0
    %232 = vmatpush1.msra.mxu0 0.0
    %233 = vmatprep.subr.mxu0 0.0
    %234 = vmatpush1.msra.mxu0 0.0
    %235 = vmatprep.subr.mxu0 0.0
    %236 = vmatpush1.msra.mxu0 0.0
    %237 = vmatprep.subr.mxu0 0.0
    %238 = vmatpush1.msra.mxu0 0.0
    %239 = vmatprep.subr.mxu0 0.0
    %240 = vmatpush1.msra.mxu0 0.0
    %241 = vmatprep.subr.mxu0 0.0
    %242 = vmatpush1.msra.mxu0 0.0
    %243 = vmatprep.mubr.f32.mxu0 0.0
    %244 = vmatmul.mubr.f32.gmra.mrb[0].mxu0 %v155
    %v245 = vpop.f32.mrb[0].mxu0
    %v246 = vadd.f32 %v177, %v245
    %v247 = vpop.f32.mrb[0].mxu0
    %248 = vdwg.mxu0
    %v249 = vmax.f32 %v246, 0.0
    %v250 = vld [vmem:[%s5] sm:$0x1]
    %s251 = sld [smem:[#allocation2]]
    %v252 = vstv %s251
    %253 = vmatprep.subr.mxu0 0.0
    %254 = vmatpush1.xpose.msra.mxu0 %v249
    %255 = vmatprep.subr.mxu0 0.0
    %256 = vmatpush1.xpose.msra.mxu0 0.0
    %257 = vmatprep.subr.mxu0 0.0
    %258 = vmatpush1.xpose.msra.mxu0 0.0
    %259 = vmatprep.subr.mxu0 0.0
    %260 = vmatpush1.xpose.msra.mxu0 0.0
    %261 = vmatprep.subr.mxu0 0.0
    %262 = vmatpush1.xpose.msra.mxu0 0.0
    %263 = vmatprep.subr.mxu0 0.0
    %264 = vmatpush1.xpose.msra.mxu0 0.0
    %265 = vmatprep.subr.mxu0 0.0
    %266 = vmatpush1.xpose.msra.mxu0 0.0
    %267 = vmatprep.subr.mxu0 0.0
    %268 = vmatpush1.xpose.msra.mxu0 0.0
    %269 = vmatprep.subr.mxu0 0.0
    %270 = vmatpush1.xpose.msra.mxu0 0.0
    %271 = vmatprep.subr.mxu0 0.0
    %272 = vmatpush1.xpose.msra.mxu0 0.0
    %273 = vmatprep.subr.mxu0 0.0
    %274 = vmatpush1.xpose.msra.mxu0 0.0
    %275 = vmatprep.subr.mxu0 0.0
    %276 = vmatpush1.xpose.msra.mxu0 0.0
    %277 = vmatprep.subr.mxu0 0.0
    %278 = vmatpush1.xpose.msra.mxu0 0.0
    %279 = vmatprep.subr.mxu0 0.0
    %280 = vmatpush1.xpose.msra.mxu0 0.0
    %281 = vmatprep.subr.mxu0 0.0
    %282 = vmatpush1.xpose.msra.mxu0 0.0
    %283 = vmatprep.subr.mxu0 0.0
    %284 = vmatpush1.xpose.msra.mxu0 0.0
    %285 = vmatprep.subr.mxu0 0.0
    %286 = vmatpush1.xpose.msra.mxu0 0.0
    %287 = vmatprep.subr.mxu0 0.0
    %288 = vmatpush1.xpose.msra.mxu0 0.0
    %289 = vmatprep.subr.mxu0 0.0
    %290 = vmatpush1.xpose.msra.mxu0 0.0
    %291 = vmatprep.subr.mxu0 0.0
    %292 = vmatpush1.xpose.msra.mxu0 0.0
    %293 = vmatprep.subr.mxu0 0.0
    %294 = vmatpush1.xpose.msra.mxu0 0.0
    %295 = vmatprep.subr.mxu0 0.0
    %296 = vmatpush1.xpose.msra.mxu0 0.0
    %297 = vmatprep.subr.mxu0 0.0
    %298 = vmatpush1.xpose.msra.mxu0 0.0
    %299 = vmatprep.subr.mxu0 0.0
    %300 = vmatpush1.xpose.msra.mxu0 0.0
    %301 = vmatprep.subr.mxu0 0.0
    %302 = vmatpush1.xpose.msra.mxu0 0.0
    %303 = vmatprep.subr.mxu0 0.0
    %304 = vmatpush1.xpose.msra.mxu0 0.0
    %305 = vmatprep.subr.mxu0 0.0
    %306 = vmatpush1.xpose.msra.mxu0 0.0
    %307 = vmatprep.subr.mxu0 0.0
    %308 = vmatpush1.xpose.msra.mxu0 0.0
    %309 = vmatprep.subr.mxu0 0.0
    %310 = vmatpush1.xpose.msra.mxu0 0.0
    %311 = vmatprep.subr.mxu0 0.0
    %312 = vmatpush1.xpose.msra.mxu0 0.0
    %313 = vmatprep.subr.mxu0 0.0
    %314 = vmatpush1.xpose.msra.mxu0 0.0
    %315 = vmatprep.subr.mxu0 0.0
    %316 = vmatpush1.xpose.msra.mxu0 0.0
    %317 = vmatprep.mubr.f32.mxu0 0.0
    %318 = vmatmul.mubr.f32.gmra.mrb[0].mxu0 %v250
    %v319 = vpop.f32.mrb[0].mxu0
    %v320 = vadd.f32 %v252, %v319
    %v321 = vpop.f32.mrb[0].mxu0
    %322 = vdwg.mxu0
    %vm323 = vcmask 57344
    %324 = vst.msk [vmem:[#allocation9] sm:$0x1] %vm323, %v320
    // Predicated region
    $region42: #{tpu_custom_call.1} parent=1 // pred_check
      _
    $region43: #{tpu_custom_call.1} parent=1 // pred_check_branch
      %326 = sbr.rel (0) target = $region45
    $region44: #{tpu_custom_call.1} parent=1 // pred_region
      %s328 = ssub.s32 16, 16
      %329 = vsyncadd [#allocation5], %s328
      %s331 = sshll.u32 [#allocation9], 4
      %s332 = int_to_ptr.vmem [resolvable:$true] %s331
      %334 = dma.vmem_to_hbm [thread:$0]  %s332, 16, %s7, [#allocation5]
    $region45: #{tpu_custom_call.1} parent=1 // pred_fallthru
      _
    // Predicated region
    $region46: #{tpu_custom_call.1} parent=1 // pred_check
      _
    $region47: #{tpu_custom_call.1} parent=1 // pred_check_branch
      %336 = sbr.rel (0) target = $region49
    $region48: #{tpu_custom_call.1} parent=1 // pred_region
      %337 = dma.done [#allocation5], 16
    $region49: #{tpu_custom_call.1} parent=1 // pred_fallthru
      _
    %338 = vsyncpa [#allocation4], 1
    %339 = vsyncpa [#allocation7], 1
    %340 = vsyncpa [#allocation5], 1

</llo_original>
